<compile_context>
chip_gen: v7x
topology: tpu7x:2x2x1
jax: 0.10.0
libtpu: 0.0.40
codegen_flags: <defaults>
</compile_context>

<pallas_src>
import jax
import jax.numpy as jnp
from jax.experimental import pallas as pl
from jax.experimental.pallas import tpu as pltpu

LANE = 128
NCORES = 2             # outer "parallel" axis: both TCs on v7x; harmless on v5e/v6e
MAX_BLOCK_ROWS = 2048  # 2048 x 128 f32 = 1 MiB/block -> 4 MiB with 2 inputs x 2 buffers


def _mcc_partial_kernel(o_ref, t_ref, out_ref, acc_ref):
    """Accumulate lane-wise partial sums of o, t and o*t for one core.

    o_ref, t_ref : (block_rows, 128) f32 tiles
    out_ref      : (1, 8, 128) f32 per-core partials (rows 0/1/2 = S_o/S_t/S_ot)
    acc_ref      : VMEM (8, 128) f32 running lane-wise accumulator
    """
    i = pl.program_id(1)

    @pl.when(i == 0)
    def _():
        acc_ref[...] = jnp.zeros_like(acc_ref)

    o = o_ref[...]
    t = t_ref[...]
    # Sublane reductions only (cheap, hidden under the DMA); no cross-lane
    # work inside the hot loop.
    acc_ref[0:1, :] += jnp.sum(o, axis=0, keepdims=True)
    acc_ref[1:2, :] += jnp.sum(t, axis=0, keepdims=True)
    acc_ref[2:3, :] += jnp.sum(o * t, axis=0, keepdims=True)

    @pl.when(i == pl.num_programs(1) - 1)
    def _():
        out_ref[0, :, :] = acc_ref[...]


def mcc_loss(outputs: jax.Array, targets: jax.Array, smooth: float = 1e-6) -> jax.Array:
    """1 - MCC(outputs, targets), matching the PyTorch MCCLoss.forward semantics."""
    o = outputs.reshape(-1).astype(jnp.float32)
    t = targets.reshape(-1).astype(jnp.float32)
    L = o.shape[0]

    rows_raw = pl.cdiv(L, LANE)
    # Block rows: multiple of 8, capped at MAX_BLOCK_ROWS, sized so small
    # inputs collapse to a single block per core.
    block_rows = min(MAX_BLOCK_ROWS, max(8, pl.cdiv(rows_raw, NCORES * 8) * 8))
    rows = pl.cdiv(rows_raw, NCORES * block_rows) * NCORES * block_rows
    Lp = rows * LANE
    pad = Lp - L
    if pad:
        # Zero padding contributes nothing to S_o / S_t / S_ot.
        o = jnp.pad(o, (0, pad))
        t = jnp.pad(t, (0, pad))

    o2 = o.reshape(rows, LANE)
    t2 = t.reshape(rows, LANE)

    inner = rows // (NCORES * block_rows)
    in_spec = pl.BlockSpec((block_rows, LANE), lambda c, i: (c * inner + i, 0))

    partials = pl.pallas_call(
        _mcc_partial_kernel,
        out_shape=jax.ShapeDtypeStruct((NCORES, 8, LANE), jnp.float32),
        grid_spec=pltpu.PrefetchScalarGridSpec(
            num_scalar_prefetch=0,
            grid=(NCORES, inner),
            in_specs=[in_spec, in_spec],
            out_specs=pl.BlockSpec((1, 8, LANE), lambda c, i: (c, 0, 0)),
            scratch_shapes=[pltpu.VMEM((8, LANE), jnp.float32)],
        ),
        compiler_params=pltpu.CompilerParams(
            dimension_semantics=("parallel", "arbitrary"),
        ),
    )(o2, t2)

    # Tiny epilogue in plain JAX: combine per-core lane-wise partials.
    s_o = jnp.sum(partials[:, 0, :])
    s_t = jnp.sum(partials[:, 1, :])
    s_ot = jnp.sum(partials[:, 2, :])

    TP = s_ot
    FP = s_o - s_ot
    FN = s_t - s_ot
    TN = jnp.float32(L) - s_o - s_t + s_ot

    numerator = TP * TN - FP * FN
    # sqrt each factor before multiplying: avoids f32 overflow of the
    # intermediate 4-way product for very large element counts.
    denominator = (
        jnp.sqrt(TP + FP) * jnp.sqrt(TP + FN) * jnp.sqrt(TN + FP) * jnp.sqrt(TN + FN)
    )
    mcc = numerator / (denominator + smooth)
    return 1.0 - mcc


def _mcc_loss_ref(outputs, targets, smooth=1e-6):
    o = outputs.reshape(-1).astype(jnp.float32)
    t = targets.reshape(-1).astype(jnp.float32)
    TP = jnp.sum(o * t)
    TN = jnp.sum((1 - o) * (1 - t))
    FP = jnp.sum(o * (1 - t))
    FN = jnp.sum((1 - o) * t)
    num = TP * TN - FP * FN
    den = jnp.sqrt((TP + FP) * (TP + FN) * (TN + FP) * (TN + FN))
    return 1.0 - num / (den + smooth)


if __name__ == "__main__":
    key = jax.random.PRNGKey(0)
    k1, k2 = jax.random.split(key)

    # Small shapes consistent with segmentation-style usage: (N, C, H, W)
    shape = (2, 4, 16, 16)
    # "outputs" are post-sigmoid probabilities in [0, 1]; targets are binary.
    outputs = jax.nn.sigmoid(jax.random.normal(k1, shape, dtype=jnp.float32))
    targets = (jax.random.uniform(k2, shape) > 0.5).astype(jnp.float32)

    loss = mcc_loss(outputs, targets)
    loss = jax.block_until_ready(loss)

    ref = _mcc_loss_ref(outputs, targets)
    assert jnp.allclose(loss, ref, atol=1e-5, rtol=1e-5), (loss, ref)

    print("KERNEL_OK")
</pallas_src>

<mosaic_0001>
module attributes {stable_mosaic.version = 11 : i64} {
  func.func @_mcc_partial_kernel(%arg0: i32, %arg1: i32, %arg2: memref<8x128xf32, #tpu.memory_space<vmem>>, %arg3: memref<8x128xf32, #tpu.memory_space<vmem>>, %arg4: memref<1x8x128xf32, #tpu.memory_space<vmem>>, %arg5: memref<8x128xf32, #tpu.memory_space<vmem>>) attributes {dimension_semantics = [#tpu.dimension_semantics<parallel>, #tpu.dimension_semantics<arbitrary>], iteration_bounds = array<i64: 2, 1>, scalar_prefetch = 0 : i64, scratch_operands = 1 : i64, tpu.core_type = #tpu.core_type<tc>, window_params = [{transform_indices = @transform_0, window_bounds = array<i64: 8, 128>}, {transform_indices = @transform_1, window_bounds = array<i64: 8, 128>}, {transform_indices = @transform_2, window_bounds = array<i64: 1, 8, 128>}]} {
    %c0_i32 = arith.constant 0 : i32
    %0 = arith.cmpi eq, %arg1, %c0_i32 : i32
    %1 = arith.extui %0 : i1 to i32
    %c0_i32_0 = arith.constant 0 : i32
    %2 = arith.cmpi ne, %1, %c0_i32_0 : i32
    scf.if %2 {
      %cst_18 = arith.constant 0.000000e+00 : f32
      %24 = vector.broadcast %cst_18 : f32 to vector<8x128xf32>
      %c0_19 = arith.constant 0 : index
      %c0_20 = arith.constant 0 : index
      %25 = vector.load %arg5[%c0_19, %c0_20] : memref<8x128xf32, #tpu.memory_space<vmem>>, vector<8x128xf32>
      tpu.vector_store %arg5[%c0_19, %c0_20], %24 {strides = array<i32>} : memref<8x128xf32, #tpu.memory_space<vmem>>, vector<8x128xf32>,
    } else {
    }
    %c0 = arith.constant 0 : index
    %c0_1 = arith.constant 0 : index
    %3 = vector.load %arg2[%c0, %c0_1] : memref<8x128xf32, #tpu.memory_space<vmem>>, vector<8x128xf32>
    %c0_2 = arith.constant 0 : index
    %c0_3 = arith.constant 0 : index
    %4 = vector.load %arg3[%c0_2, %c0_3] : memref<8x128xf32, #tpu.memory_space<vmem>>, vector<8x128xf32>
    %c0_4 = arith.constant 0 : index
    %c0_5 = arith.constant 0 : index
    %5 = vector.load %arg5[%c0_4, %c0_5] : memref<8x128xf32, #tpu.memory_space<vmem>>, vector<1x128xf32>
    %cst = arith.constant dense<0.000000e+00> : vector<128xf32>
    %6 = vector.multi_reduction <add>, %3, %cst [0] : vector<8x128xf32> to vector<128xf32>
    %7 = vector.shape_cast %6 : vector<128xf32> to vector<1x128xf32>
    %8 = arith.addf %5, %7 : vector<1x128xf32>
    %c0_6 = arith.constant 0 : index
    %c0_7 = arith.constant 0 : index
    %9 = vector.load %arg5[%c0_6, %c0_7] : memref<8x128xf32, #tpu.memory_space<vmem>>, vector<1x128xf32>
    tpu.vector_store %arg5[%c0_6, %c0_7], %8 {strides = array<i32>} : memref<8x128xf32, #tpu.memory_space<vmem>>, vector<1x128xf32>,
    %c1 = arith.constant 1 : index
    %c0_8 = arith.constant 0 : index
    %10 = vector.load %arg5[%c1, %c0_8] : memref<8x128xf32, #tpu.memory_space<vmem>>, vector<1x128xf32>
    %cst_9 = arith.constant dense<0.000000e+00> : vector<128xf32>
    %11 = vector.multi_reduction <add>, %4, %cst_9 [0] : vector<8x128xf32> to vector<128xf32>
    %12 = vector.shape_cast %11 : vector<128xf32> to vector<1x128xf32>
    %13 = arith.addf %10, %12 : vector<1x128xf32>
    %c1_10 = arith.constant 1 : index
    %c0_11 = arith.constant 0 : index
    %14 = vector.load %arg5[%c1_10, %c0_11] : memref<8x128xf32, #tpu.memory_space<vmem>>, vector<1x128xf32>
    tpu.vector_store %arg5[%c1_10, %c0_11], %13 {strides = array<i32>} : memref<8x128xf32, #tpu.memory_space<vmem>>, vector<1x128xf32>,
    %c2 = arith.constant 2 : index
    %c0_12 = arith.constant 0 : index
    %15 = vector.load %arg5[%c2, %c0_12] : memref<8x128xf32, #tpu.memory_space<vmem>>, vector<1x128xf32>
    %16 = arith.mulf %3, %4 : vector<8x128xf32>
    %cst_13 = arith.constant dense<0.000000e+00> : vector<128xf32>
    %17 = vector.multi_reduction <add>, %16, %cst_13 [0] : vector<8x128xf32> to vector<128xf32>
    %18 = vector.shape_cast %17 : vector<128xf32> to vector<1x128xf32>
    %19 = arith.addf %15, %18 : vector<1x128xf32>
    %c2_14 = arith.constant 2 : index
    %c0_15 = arith.constant 0 : index
    %20 = vector.load %arg5[%c2_14, %c0_15] : memref<8x128xf32, #tpu.memory_space<vmem>>, vector<1x128xf32>
    tpu.vector_store %arg5[%c2_14, %c0_15], %19 {strides = array<i32>} : memref<8x128xf32, #tpu.memory_space<vmem>>, vector<1x128xf32>,
    %c0_i32_16 = arith.constant 0 : i32
    %21 = arith.cmpi eq, %arg1, %c0_i32_16 : i32
    %22 = arith.extui %21 : i1 to i32
    %c0_i32_17 = arith.constant 0 : i32
    %23 = arith.cmpi ne, %22, %c0_i32_17 : i32
    scf.if %23 {
      %c0_18 = arith.constant 0 : index
      %c0_19 = arith.constant 0 : index
      %24 = vector.load %arg5[%c0_18, %c0_19] : memref<8x128xf32, #tpu.memory_space<vmem>>, vector<8x128xf32>
      %c0_20 = arith.constant 0 : index
      %c0_21 = arith.constant 0 : index
      %c0_22 = arith.constant 0 : index
      %25 = vector.load %arg4[%c0_20, %c0_21, %c0_22] : memref<1x8x128xf32, #tpu.memory_space<vmem>>, vector<1x8x128xf32>
      %26 = vector.shape_cast %25 : vector<1x8x128xf32> to vector<8x128xf32>
      %27 = vector.shape_cast %24 : vector<8x128xf32> to vector<1x8x128xf32>
      tpu.vector_store %arg4[%c0_20, %c0_21, %c0_22], %27 {strides = array<i32>} : memref<1x8x128xf32, #tpu.memory_space<vmem>>, vector<1x8x128xf32>,
    } else {
    }
    return
  }
  func.func @transform_0(%arg0: i32, %arg1: i32) -> (i32, i32) {
    %c1_i32 = arith.constant 1 : i32
    %0 = arith.muli %arg0, %c1_i32 : i32
    %1 = arith.addi %0, %arg1 : i32
    %c0_i32 = arith.constant 0 : i32
    %c0_i32_0 = arith.constant 0 : i32
    return %1, %c0_i32 : i32, i32
  }
  func.func @transform_1(%arg0: i32, %arg1: i32) -> (i32, i32) {
    %c1_i32 = arith.constant 1 : i32
    %0 = arith.muli %arg0, %c1_i32 : i32
    %1 = arith.addi %0, %arg1 : i32
    %c0_i32 = arith.constant 0 : i32
    %c0_i32_0 = arith.constant 0 : i32
    return %1, %c0_i32 : i32, i32
  }
  func.func @transform_2(%arg0: i32, %arg1: i32) -> (i32, i32, i32) {
    %c0_i32 = arith.constant 0 : i32
    %c0_i32_0 = arith.constant 0 : i32
    %c0_i32_1 = arith.constant 0 : i32
    return %arg0, %c0_i32, %c0_i32_0 : i32, i32, i32
  }
}

</mosaic_0001>

<llo_original>
// kernel: tpu_custom_call.1
$region0: #{tpu_custom_call.1}
  #allocation0 [shape = 'u32[]', space=smem, size = 0x4, offset = 0x4, fixed_abs, tag = 'smem constant byte address 0x4 - core index']
  #allocation1 [shape = 'u32[144,128]{1,0:T(1,128)}', space=vmem, size = 0x12000, scoped, tag = 'internal scratch']
  #allocation2 [shape = 'f32[8,128]{1,0:T(8,128)}', space=vmem, size = 0x1000, scoped, tag = 'scratch operand']
  %s0 = inlined_call_operand.hbm [shape: f32[16,128], index: 0, kind: input, shape index: {}]
  %s1 = inlined_call_operand.hbm [shape: f32[16,128], index: 1, kind: input, shape index: {}]
  %s2 = inlined_call_operand.hbm [shape: f32[2,8,128], index: 2, kind: output, shape index: {}]
  %s3 = sld [smem:[#allocation0]]
  $region57: #{tpu_custom_call.1} parent=0
    _
  %s5 = ssub.s32 1, %s3
  %s6 = scalar_select 0, %s5, %s3
  $region1: #{tpu_custom_call.1} parent=0
    #allocation3 [shape = 'u8[8192]{0}', space=vmem, size = 0x2000, scoped, tag = 'input window, operand 0']
    #allocation4 [shape = 's32[2]{0}', space=sflag, size = 0x8, scoped, tag = 'scoped memory for tpu_custom_call.1']
    #allocation5 [shape = 's32[2]{0}', space=sflag, size = 0x8, scoped, tag = 'scoped memory for tpu_custom_call.1']
    #allocation6 [shape = 'u8[8192]{0}', space=vmem, size = 0x2000, scoped, tag = 'input window, operand 1']
    #allocation7 [shape = 's32[2]{0}', space=sflag, size = 0x8, scoped, tag = 'scoped memory for tpu_custom_call.1']
    #allocation8 [shape = 'u8[8192]{0}', space=vmem, size = 0x2000, scoped, tag = 'output window, operand 0']
    %7 = vsyncpa [#allocation4], 0
    %s8 = scalar_lea.sflag [#allocation4], 1
    %9 = vsyncpa %s8, 0
    %10 = vsyncpa [#allocation7], 0
    %s11 = scalar_lea.sflag [#allocation7], 1
    %12 = vsyncpa %s11, 0
    %13 = vsyncpa [#allocation5], 0
    %s14 = scalar_lea.sflag [#allocation5], 1
    %15 = vsyncpa %s14, 0
    loop: start=0, step=1, limit=4
    $region2: #{tpu_custom_call.1} parent=1 // loop_pre_header
      _
    $region3: #{tpu_custom_call.1} parent=1 // loop_header
      %s17 = sphi 0, %s21
      %p18 = scmp.ge.s32.totalorder %s17, 4
      %s24 = sphi 0, %s36
      %s25 = sphi 0, %s32
      %s26 = sphi 0, %s24
      %s27 = sphi 0, %s25
      %s28 = sphi 0, %s26
      %s29 = sphi 0, %s27
      %s41 = sphi 0, %s43
      %s44 = sphi 0, %s41
      %s45 = sphi 0, %s44
      %s61 = sphi 0, %s45
      %s69 = sphi 0, %s71
      %s72 = sphi 0, %s69
      %s73 = sphi 0, %s72
      %s89 = sphi 0, %s73
      %s95 = sphi 0, %s97
      %s98 = sphi 0, %s95
      %s99 = sphi 0, %s98
      %s115 = sphi 0, %s99
    $region4: #{tpu_custom_call.1} parent=1 // loop_header_branch
      %20 = sbr.rel (%p18) target = $region8
    $region5: #{tpu_custom_call.1} parent=1 // loop_body
      %s22 = ssub.s32 %s17, 1
      %s23 = ssub.s32 %s17, 2
      %s30 = sadd.s32 1, %s25
      %p31 = scmp.ge.s32.totalorder %s30, 1
      %s32 = scalar_select %p31, 0, %s30
      %s33 = sadd.s32 1, %s24
      %s34 = scalar_select %p31, %s33, %s24
      %p35 = scmp.ge.s32.totalorder %s34, 2
      %s36 = scalar_select %p35, 0, %s34
      %s37 = sadd.s32 %s24, %s25
      %s38 = sadd.s32 %s36, %s32
      %s39 = ssub.s32 %s37, %s38
      %p40 = scmp.eq.s32.totalorder %s39, 0
      %s42 = sadd.s32 %s41, 1
      %s43 = scalar_select %p40, %s41, %s42
      %p46 = pneg %p40
      %p47 = scmp.eq.s32.totalorder %s17, 1
      %p48 = por %p46, %p47
      %p49 = scmp.ne.s32.totalorder %s41, %s44
      %p50 = scmp.eq.s32.totalorder %s17, 0
      %p51 = por %p49, %p50
      %p52 = scmp.ne.s32.totalorder %s41, %s44
      %p53 = scmp.eq.s32.totalorder %s22, 1
      %p54 = por %p52, %p53
      %p55 = scmp.ne.s32.totalorder %s44, %s45
      %p56 = scmp.eq.s32.totalorder %s22, 0
      %p57 = por %p55, %p56
      %p58 = scmp.ne.s32.totalorder %s44, %s45
      %p59 = scmp.eq.s32.totalorder %s23, 1
      %p60 = por %p58, %p59
      %p62 = scmp.ne.s32.totalorder %s45, %s61
      %p63 = scmp.eq.s32.totalorder %s23, 0
      %p64 = por %p62, %p63
      %s65 = sadd.s32 %s24, %s25
      %s66 = sadd.s32 %s36, %s32
      %s67 = ssub.s32 %s65, %s66
      %p68 = scmp.eq.s32.totalorder %s67, 0
      %s70 = sadd.s32 %s69, 1
      %s71 = scalar_select %p68, %s69, %s70
      %p74 = pneg %p68
      %p75 = scmp.eq.s32.totalorder %s17, 1
      %p76 = por %p74, %p75
      %p77 = scmp.ne.s32.totalorder %s69, %s72
      %p78 = scmp.eq.s32.totalorder %s17, 0
      %p79 = por %p77, %p78
      %p80 = scmp.ne.s32.totalorder %s69, %s72
      %p81 = scmp.eq.s32.totalorder %s22, 1
      %p82 = por %p80, %p81
      %p83 = scmp.ne.s32.totalorder %s72, %s73
      %p84 = scmp.eq.s32.totalorder %s22, 0
      %p85 = por %p83, %p84
      %p86 = scmp.ne.s32.totalorder %s72, %s73
      %p87 = scmp.eq.s32.totalorder %s23, 1
      %p88 = por %p86, %p87
      %p90 = scmp.ne.s32.totalorder %s73, %s89
      %p91 = scmp.eq.s32.totalorder %s23, 0
      %p92 = por %p90, %p91
      %s93 = ssub.s32 %s24, %s36
      %p94 = scmp.eq.s32.totalorder %s93, 0
      %s96 = sadd.s32 %s95, 1
      %s97 = scalar_select %p94, %s95, %s96
      %p100 = pneg %p94
      %p101 = scmp.eq.s32.totalorder %s17, 1
      %p102 = por %p100, %p101
      %p103 = scmp.ne.s32.totalorder %s95, %s98
      %p104 = scmp.eq.s32.totalorder %s17, 0
      %p105 = por %p103, %p104
      %p106 = scmp.ne.s32.totalorder %s95, %s98
      %p107 = scmp.eq.s32.totalorder %s22, 1
      %p108 = por %p106, %p107
      %p109 = scmp.ne.s32.totalorder %s98, %s99
      %p110 = scmp.eq.s32.totalorder %s22, 0
      %p111 = por %p109, %p110
      %p112 = scmp.ne.s32.totalorder %s98, %s99
      %p113 = scmp.eq.s32.totalorder %s23, 1
      %p114 = por %p112, %p113
      %p116 = scmp.ne.s32.totalorder %s99, %s115
      %p117 = scmp.eq.s32.totalorder %s23, 0
      %p118 = por %p116, %p117
      %p119 = scmp.le.s32.totalorder 1, %s17
      %p120 = scmp.lt.s32.totalorder %s17, 3
      %p121 = pnand %p119, %p120
      %p122 = pneg %p121
      // Predicated region
      $region9: #{tpu_custom_call.1} parent=5 // pred_check
        _
      $region10: #{tpu_custom_call.1} parent=5 // pred_check_branch
        %124 = sbr.rel (%p121) target = $region12
      $region11: #{tpu_custom_call.1} parent=5 // pred_region
        %s125 = ssub.s32 %s17, 1
      $region12: #{tpu_custom_call.1} parent=5 // pred_fallthru
        _
      %p126 = scmp.lt.s32.totalorder %s17, 2
      // Predicated region
      $region13: #{tpu_custom_call.1} parent=5 // pred_check
        %p127 = pneg %p126
      $region14: #{tpu_custom_call.1} parent=5 // pred_check_branch
        %129 = sbr.rel (%p127) target = $region16
      $region15: #{tpu_custom_call.1} parent=5 // pred_region
        // Predicated region
        $region17: #{tpu_custom_call.1} parent=15 // pred_check
          %p130 = pneg %p51
        $region18: #{tpu_custom_call.1} parent=15 // pred_check_branch
          %132 = sbr.rel (%p130) target = $region20
        $region19: #{tpu_custom_call.1} parent=15 // pred_region
          %s133 = sand.u32 %s41, 1
          %s134 = scalar_lea.sflag [#allocation4], %s133
          %s135 = sand.u32 %s41, 1
          %s136 = smul.addr %s135, 8
          %s137 = scalar_lea.vmem [#allocation3], %s136
          %s138 = sadd.s32 %s24, %s25
          %s140 = ssub.s32 128, 128
          %141 = vsyncadd %s134, %s140
          %s142 = smul.addr %s138, 128
          %s143 = scalar_lea.hbm %s0, %s142
          %s145 = sshll.u32 %s137, 4
          %s146 = int_to_ptr.vmem [resolvable:$true] %s145
          %148 = dma.hbm_to_vmem [thread:$0]  %s143, 128, %s146, %s134
        $region20: #{tpu_custom_call.1} parent=15 // pred_fallthru
          _
        // Predicated region
        $region21: #{tpu_custom_call.1} parent=15 // pred_check
          %p149 = pneg %p79
        $region22: #{tpu_custom_call.1} parent=15 // pred_check_branch
          %151 = sbr.rel (%p149) target = $region24
        $region23: #{tpu_custom_call.1} parent=15 // pred_region
          %s152 = sand.u32 %s69, 1
          %s153 = scalar_lea.sflag [#allocation7], %s152
          %s154 = sand.u32 %s69, 1
          %s155 = smul.addr %s154, 8
          %s156 = scalar_lea.vmem [#allocation6], %s155
          %s157 = sadd.s32 %s24, %s25
          %s159 = ssub.s32 128, 128
          %160 = vsyncadd %s153, %s159
          %s161 = smul.addr %s157, 128
          %s162 = scalar_lea.hbm %s1, %s161
          %s164 = sshll.u32 %s156, 4
          %s165 = int_to_ptr.vmem [resolvable:$true] %s164
          %167 = dma.hbm_to_vmem [thread:$0]  %s162, 128, %s165, %s153
        $region24: #{tpu_custom_call.1} parent=15 // pred_fallthru
          _
      $region16: #{tpu_custom_call.1} parent=5 // pred_fallthru
        _
      %p168 = scmp.le.s32.totalorder 1, %s17
      %p169 = scmp.lt.s32.totalorder %s17, 3
      %p170 = pnand %p168, %p169
      %p171 = pneg %p170
      // Predicated region
      $region25: #{tpu_custom_call.1} parent=5 // pred_check
        _
      $region26: #{tpu_custom_call.1} parent=5 // pred_check_branch
        %173 = sbr.rel (%p170) target = $region28
      $region27: #{tpu_custom_call.1} parent=5 // pred_region
        %s174 = ssub.s32 %s17, 1
        %s175 = sand.u32 %s44, 1
        %s176 = scalar_lea.sflag [#allocation4], %s175
        %s177 = sand.u32 %s44, 1
        %s178 = smul.addr %s177, 8
        %s179 = scalar_lea.vmem [#allocation3], %s178
        // Predicated region
        $region29: #{tpu_custom_call.1} parent=27 // pred_check
          %p180 = pneg %p57
        $region30: #{tpu_custom_call.1} parent=27 // pred_check_branch
          %182 = sbr.rel (%p180) target = $region32
        $region31: #{tpu_custom_call.1} parent=27 // pred_region
          %183 = dma.done %s176, 128
        $region32: #{tpu_custom_call.1} parent=27 // pred_fallthru
          _
        %s184 = sand.u32 %s72, 1
        %s185 = scalar_lea.sflag [#allocation7], %s184
        %s186 = sand.u32 %s72, 1
        %s187 = smul.addr %s186, 8
        %s188 = scalar_lea.vmem [#allocation6], %s187
        // Predicated region
        $region33: #{tpu_custom_call.1} parent=27 // pred_check
          %p189 = pneg %p85
        $region34: #{tpu_custom_call.1} parent=27 // pred_check_branch
          %191 = sbr.rel (%p189) target = $region36
        $region35: #{tpu_custom_call.1} parent=27 // pred_region
          %192 = dma.done %s185, 128
        $region36: #{tpu_custom_call.1} parent=27 // pred_fallthru
          _
        %s193 = sand.u32 %s44, 1
        %s194 = scalar_lea.sflag [#allocation4], %s193
        %s195 = sand.u32 %s44, 1
        %s196 = smul.addr %s195, 8
        %s197 = scalar_lea.vmem [#allocation3], %s196
        %p198 = pneg %p57
        %p199 = pneg %p54
        %s200 = sand.u32 %s72, 1
        %s201 = scalar_lea.sflag [#allocation7], %s200
        %s202 = sand.u32 %s72, 1
        %s203 = smul.addr %s202, 8
        %s204 = scalar_lea.vmem [#allocation6], %s203
        %p205 = pneg %p85
        %p206 = pneg %p82
        %p207 = pneg %p111
        %p208 = pneg %p108
        %s209 = sand.u32 %s98, 1
        %s210 = scalar_lea.sflag [#allocation5], %s209
        %s211 = sand.u32 %s98, 1
        %s212 = smul.addr %s211, 8
        %s213 = scalar_lea.vmem [#allocation8], %s212
        %s214 = sadd.s32 %s26, %s27
        %s215 = sadd.s32 %s26, %s27
        %p216 = scmp.eq.s32.totalorder %s27, 0
        // Predicated region
        $region37: #{tpu_custom_call.1} parent=27 // pred_check
          %p217 = pneg %p216
        $region38: #{tpu_custom_call.1} parent=27 // pred_check_branch
          %219 = sbr.rel (%p217) target = $region40
        $region39: #{tpu_custom_call.1} parent=27 // pred_region
          %220 = vst [vmem:[#allocation2] sm:$0xff] 0.0
        $region40: #{tpu_custom_call.1} parent=27 // pred_fallthru
          _
        %v221 = vld [vmem:[%s179] sm:$0xff]
        %v222 = vld [vmem:[%s188] sm:$0xff]
        %v223 = vld [vmem:[#allocation2] sm:$0x1]
        %v224 = vrot.slane %v221, 4
        %v225 = vadd.f32 %v221, %v224
        %v226 = vrot.slane %v225, 2
        %v227 = vadd.f32 %v225, %v226
        %v228 = vrot.slane %v227, 1
        %v229 = vadd.f32 %v227, %v228
        %v230 = vadd.f32 %v223, %v229
        %231 = vst [vmem:[#allocation2] sm:$0x1] %v230
        %v232 = vld [vmem:[#allocation2 + $0x1] sm:$0x1]
        %v233 = vrot.slane %v222, 4
        %v234 = vadd.f32 %v222, %v233
        %v235 = vrot.slane %v234, 2
        %v236 = vadd.f32 %v234, %v235
        %v237 = vrot.slane %v236, 1
        %v238 = vadd.f32 %v236, %v237
        %v239 = vadd.f32 %v232, %v238
        %240 = vst [vmem:[#allocation2 + $0x1] sm:$0x1] %v239
        %v241 = vld [vmem:[#allocation2 + $0x2] sm:$0x1]
        %v242 = vmul.f32 %v221, %v222
        %v243 = vrot.slane %v242, 4
        %v244 = vadd.f32 %v242, %v243
        %v245 = vrot.slane %v244, 2
        %v246 = vadd.f32 %v244, %v245
        %v247 = vrot.slane %v246, 1
        %v248 = vadd.f32 %v246, %v247
        %v249 = vadd.f32 %v241, %v248
        %250 = vst [vmem:[#allocation2 + $0x2] sm:$0x1] %v249
        // Predicated region
        $region41: #{tpu_custom_call.1} parent=27 // pred_check
          %p251 = pneg %p216
        $region42: #{tpu_custom_call.1} parent=27 // pred_check_branch
          %253 = sbr.rel (%p251) target = $region44
        $region43: #{tpu_custom_call.1} parent=27 // pred_region
          %v254 = vld [vmem:[#allocation2] sm:$0xff]
          %255 = vst [vmem:[%s213] sm:$0xff] %v254
        $region44: #{tpu_custom_call.1} parent=27 // pred_fallthru
          _
        %s256 = sand.u32 %s98, 1
        %s257 = scalar_lea.sflag [#allocation5], %s256
        %s258 = sand.u32 %s98, 1
        %s259 = smul.addr %s258, 8
        %s260 = scalar_lea.vmem [#allocation8], %s259
        // Predicated region
        $region45: #{tpu_custom_call.1} parent=27 // pred_check
          %p261 = pneg %p108
        $region46: #{tpu_custom_call.1} parent=27 // pred_check_branch
          %263 = sbr.rel (%p261) target = $region48
        $region47: #{tpu_custom_call.1} parent=27 // pred_region
          %s265 = ssub.s32 128, 128
          %266 = vsyncadd %s257, %s265
          %s267 = smul.addr %s26, 128
          %s268 = scalar_lea.hbm %s2, %s267
          %s270 = sshll.u32 %s260, 4
          %s271 = int_to_ptr.vmem [resolvable:$true] %s270
          %273 = dma.vmem_to_hbm [thread:$0]  %s271, 128, %s268, %s257
        $region48: #{tpu_custom_call.1} parent=27 // pred_fallthru
          _
      $region28: #{tpu_custom_call.1} parent=5 // pred_fallthru
        _
      %p274 = scmp.le.s32.totalorder 2, %s17
      // Predicated region
      $region49: #{tpu_custom_call.1} parent=5 // pred_check
        %p275 = pneg %p274
      $region50: #{tpu_custom_call.1} parent=5 // pred_check_branch
        %277 = sbr.rel (%p275) target = $region52
      $region51: #{tpu_custom_call.1} parent=5 // pred_region
        %s278 = ssub.s32 %s17, 2
        // Predicated region
        $region53: #{tpu_custom_call.1} parent=51 // pred_check
          %p279 = pneg %p114
        $region54: #{tpu_custom_call.1} parent=51 // pred_check_branch
          %281 = sbr.rel (%p279) target = $region56
        $region55: #{tpu_custom_call.1} parent=51 // pred_region
          %s282 = sand.u32 %s99, 1
          %s283 = scalar_lea.sflag [#allocation5], %s282
          %s284 = sand.u32 %s99, 1
          %s285 = smul.addr %s284, 8
          %s286 = scalar_lea.vmem [#allocation8], %s285
          %287 = dma.done %s283, 128
        $region56: #{tpu_custom_call.1} parent=51 // pred_fallthru
          _
      $region52: #{tpu_custom_call.1} parent=5 // pred_fallthru
        _
    $region6: #{tpu_custom_call.1} parent=1 // loop_footer
      %s21 = sadd.s32 1, %s17
    $region7: #{tpu_custom_call.1} parent=1 // loop_footer_branch
      %16 = sbr.rel target = $region3
    $region8: #{tpu_custom_call.1} parent=1 // loop_exit
      _
    %288 = vsyncpa [#allocation4], 1
    %s289 = scalar_lea.sflag [#allocation4], 1
    %290 = vsyncpa %s289, 1
    %291 = vsyncpa [#allocation7], 1
    %s292 = scalar_lea.sflag [#allocation7], 1
    %293 = vsyncpa %s292, 1
    %294 = vsyncpa [#allocation5], 1
    %s295 = scalar_lea.sflag [#allocation5], 1
    %296 = vsyncpa %s295, 1

</llo_original>
